<compile_context>
chip_gen: v7x
topology: tpu7x:2x2x1
jax: 0.10.0
libtpu: 0.0.40
codegen_flags: <defaults>
</compile_context>

<pallas_src>
import functools

import jax
import jax.numpy as jnp
from jax.experimental import pallas as pl
from jax.experimental.pallas import tpu as pltpu


def _round_up(x, m):
    return (x + m - 1) // m * m


def _cdiv(a, b):
    return (a + b - 1) // b


# --------------------- pass 1: normalize + voxel index --------------------- #
def _normalize_kernel(coords_ref, ncoords_ref, lin_ref, *,
                      resolution, normalize, eps):
    # coords_ref : (1, 3, N) f32   (lane-dense over N)
    # ncoords_ref: (1, 3, N) f32
    # lin_ref    : (1, 1, N) i32
    c = coords_ref[0].astype(jnp.float32)                      # (3, N)
    mean_c = jnp.mean(c, axis=1, keepdims=True)                # (3, 1)
    centered = c - mean_c                                      # (3, N)
    if normalize:
        norms_sq = jnp.sum(centered * centered, axis=0, keepdims=True)  # (1, N)
        max_norm = jnp.sqrt(jnp.max(norms_sq, keepdims=True))           # (1, 1)
        scale = 1.0 / (max_norm * 2.0 + eps)
        normalized = centered * scale + 0.5
    else:
        normalized = (centered + 1.0) * 0.5
    ncoords_ref[0] = normalized.astype(ncoords_ref.dtype)

    vidx = jnp.round(normalized * (resolution - 1)).astype(jnp.int32)   # (3, N)
    # Clamp so normalize=False / degenerate inputs never produce OOB ids.
    vidx = jnp.clip(vidx, 0, resolution - 1)
    lin = (vidx[0:1, :] * (resolution * resolution)
           + vidx[1:2, :] * resolution
           + vidx[2:3, :])                                              # (1, N)
    lin_ref[0] = lin


# ----------------- pass 2: scatter-add as one-hot matmul ------------------- #
def _scatter_kernel(tmin_ref, tmax_ref, iota_ref, feats_ref, lin_ref, vox_ref, *,
                    n_tile, chunk, exact_div, feats_resident):
    # tmin_ref/tmax_ref: SMEM (B, n_tiles) i32  -- per (b, n-tile) index range
    # iota_ref : (V_TILE, CHUNK) i32, grid-invariant (constant index_map)
    # feats_ref: (1, Cp, Nblk) matmul dtype; last row is all ones -> counts
    # lin_ref  : (1, 1, Nblk) i32 linear voxel index (-1 for padding points)
    # vox_ref  : (1, Cp, V_TILE) f32; resident across the N axis (accumulator)
    b = pl.program_id(0)
    v = pl.program_id(1)
    n = pl.program_id(2)

    cp = vox_ref.shape[1]
    v_tile = vox_ref.shape[2]

    @pl.when(n == 0)
    def _():
        vox_ref[...] = jnp.zeros_like(vox_ref)

    v_base = v * v_tile
    # Sparsity skip: this (v-tile, n-tile) pair only has work if the tile's
    # linear-index range overlaps [v_base, v_base + v_tile).
    has_work = jnp.logical_and(tmax_ref[b, n] >= v_base,
                               tmin_ref[b, n] < v_base + v_tile)

    @pl.when(has_work)
    def _():
        base = n * n_tile if feats_resident else 0
        n_chunks = n_tile // chunk

        def chunk_body(c, acc):
            off = pl.multiple_of(base + c * chunk, chunk)
            f_c = feats_ref[0, :, pl.ds(off, chunk)]            # (Cp, chunk)
            lin_c = lin_ref[0, :, pl.ds(off, chunk)]            # (1, chunk)
            # one_hot^T (V_TILE, chunk): sublane-broadcast compare against a
            # grid-invariant iota read straight out of VMEM. 0/1 exact in bf16.
            oh = (lin_c - v_base == iota_ref[...]).astype(f_c.dtype)
            # (Cp, V_TILE) += f_c @ oh^T ; contract the lane-dense N axis,
            # f32 accumulation on the MXU, output lane-dense over V.
            return acc + jax.lax.dot_general(
                f_c, oh, (((1,), (1,)), ((), ())),
                preferred_element_type=jnp.float32)

        acc = jax.lax.fori_loop(0, n_chunks, chunk_body,
                                jnp.zeros((cp, v_tile), jnp.float32),
                                unroll=True)
        vox_ref[0] = vox_ref[0] + acc

    @pl.when(n == pl.num_programs(2) - 1)
    def _():
        acc = vox_ref[0]                                        # (Cp, V_TILE)
        counts = jnp.maximum(acc[cp - 1:cp, :], 1.0)            # fused counts
        if exact_div:
            vox_ref[0] = acc / counts                           # f32 path
        else:
            vox_ref[0] = acc * pl.reciprocal(counts, approx=True)  # EUP slot


# -------------------------------- wrapper ---------------------------------- #
def voxelization(features, coords, *, resolution, normalize=True, eps=1e-6,
                 v_tile=512, n_tile=1024, chunk=256,
                 matmul_dtype=jnp.bfloat16,
                 resident_feats_budget_bytes=8 * 1024 * 1024):
    """Pallas equivalent of Voxelization.forward.

    Returns (avg_voxel_features [B, C, R, R, R], normalized_coords [B, N, 3]).
    v_tile / n_tile / chunk should be multiples of 128 (defaults are).
    Set matmul_dtype=jnp.float32 for near-exact sums + exact divide.
    """
    B, N, C = features.shape
    R = int(resolution)
    V = R ** 3

    # ---- pass 1: normalization + voxel indices (lane-dense over N) -------- #
    coords_t = jnp.transpose(coords, (0, 2, 1)).astype(jnp.float32)   # (B, 3, N)
    norm_kernel = functools.partial(_normalize_kernel, resolution=R,
                                    normalize=normalize, eps=eps)
    ncoords_t, lin = pl.pallas_call(
        norm_kernel,
        out_shape=(jax.ShapeDtypeStruct((B, 3, N), jnp.float32),
                   jax.ShapeDtypeStruct((B, 1, N), jnp.int32)),
        grid=(B,),
        in_specs=[pl.BlockSpec((1, 3, N), lambda b: (b, 0, 0))],
        out_specs=(pl.BlockSpec((1, 3, N), lambda b: (b, 0, 0)),
                   pl.BlockSpec((1, 1, N), lambda b: (b, 0, 0))),
        compiler_params=pltpu.CompilerParams(
            dimension_semantics=("parallel",)),
    )(coords_t)
    normalized_coords = jnp.transpose(ncoords_t, (0, 2, 1))           # (B, N, 3)

    # ---- tiling decisions -------------------------------------------------- #
    V_128 = _round_up(V, 128)
    V_TILE = min(_round_up(v_tile, 128), V_128)
    # v7x has 2 TensorCores: make sure there are >= 2 "parallel" grid units.
    if B * _cdiv(V_128, V_TILE) < 2 and V_TILE > 128:
        V_TILE = _round_up(V_TILE // 2, 128)
    V_pad = _round_up(V, V_TILE)

    N_128 = _round_up(N, 128)
    N_TILE = min(_round_up(n_tile, 128), N_128)
    N_pad = _round_up(N, N_TILE)
    n_tiles = N_pad // N_TILE
    CHUNK = min(chunk, N_TILE)
    if N_TILE % CHUNK != 0:
        CHUNK = 128
    Cp = C + 1
    itemsize = jnp.dtype(matmul_dtype).itemsize

    # ---- prepare pass-2 operands (cheap XLA ops, fused by the compiler) ---- #
    feats_t = jnp.transpose(features, (0, 2, 1)).astype(matmul_dtype)  # (B,C,N)
    ones_row = jnp.ones((B, 1, N), matmul_dtype)                       # counts
    feats_aug = jnp.concatenate([feats_t, ones_row], axis=1)           # (B,Cp,N)
    feats_aug = jnp.pad(feats_aug, ((0, 0), (0, 0), (0, N_pad - N)))

    lin_flat = lin[:, 0, :]                                            # (B, N)
    lin_pad = jnp.pad(lin, ((0, 0), (0, 0), (0, N_pad - N)),
                      constant_values=-1)                              # sentinel

    big = jnp.iinfo(jnp.int32).max
    tile_min = jnp.pad(lin_flat, ((0, 0), (0, N_pad - N)),
                       constant_values=big).reshape(B, n_tiles, N_TILE)
    tile_min = tile_min.min(axis=-1).astype(jnp.int32)                 # (B, nt)
    tile_max = jnp.pad(lin_flat, ((0, 0), (0, N_pad - N)),
                       constant_values=-1).reshape(B, n_tiles, N_TILE)
    tile_max = tile_max.max(axis=-1).astype(jnp.int32)                 # (B, nt)

    # Grid-invariant iota for the one-hot compare (DMA'd once, lives in VMEM).
    iota_arr = jax.lax.broadcasted_iota(jnp.int32, (V_TILE, CHUNK), 0)

    # Keep feats/lin resident per batch when they fit a small VMEM budget
    # (avoids re-fetching every feature tile once per V tile).
    feats_block_bytes = Cp * N_pad * itemsize * 2 + N_pad * 4 * 2
    feats_resident = feats_block_bytes <= resident_feats_budget_bytes
    if feats_resident:
        feats_spec = pl.BlockSpec((1, Cp, N_pad),
                                  lambda b, v, n, tmin, tmax: (b, 0, 0))
        lin_spec = pl.BlockSpec((1, 1, N_pad),
                                lambda b, v, n, tmin, tmax: (b, 0, 0))
    else:
        feats_spec = pl.BlockSpec((1, Cp, N_TILE),
                                  lambda b, v, n, tmin, tmax: (b, 0, n))
        lin_spec = pl.BlockSpec((1, 1, N_TILE),
                                lambda b, v, n, tmin, tmax: (b, 0, n))

    exact_div = jnp.dtype(matmul_dtype) == jnp.dtype(jnp.float32)
    scatter_kernel = functools.partial(
        _scatter_kernel, n_tile=N_TILE, chunk=CHUNK,
        exact_div=exact_div, feats_resident=feats_resident)

    # VMEM budget (v7x: 64 MiB physical / 32 MiB scoped default).
    nblk = N_pad if feats_resident else N_TILE
    vmem_est = (Cp * nblk * itemsize * 2 + nblk * 4 * 2
                + V_TILE * CHUNK * 4 * 2 + Cp * V_TILE * 4 * 2)
    compiler_kwargs = dict(
        dimension_semantics=("parallel", "parallel", "arbitrary"))
    if vmem_est > 12 * 2**20:
        compiler_kwargs["vmem_limit_bytes"] = int(
            min(max(vmem_est * 2, 33 * 2**20), 56 * 2**20))

    grid = (B, V_pad // V_TILE, n_tiles)
    vox = pl.pallas_call(
        scatter_kernel,
        out_shape=jax.ShapeDtypeStruct((B, Cp, V_pad), jnp.float32),
        grid_spec=pltpu.PrefetchScalarGridSpec(
            num_scalar_prefetch=2,
            grid=grid,
            in_specs=[
                pl.BlockSpec((V_TILE, CHUNK),
                             lambda b, v, n, tmin, tmax: (0, 0)),   # iota
                feats_spec,
                lin_spec,
            ],
            out_specs=pl.BlockSpec((1, Cp, V_TILE),
                                   lambda b, v, n, tmin, tmax: (b, 0, v)),
        ),
        compiler_params=pltpu.CompilerParams(**compiler_kwargs),
    )(tile_min, tile_max, iota_arr, feats_aug, lin_pad)

    avg_voxel_features = vox[:, :C, :V].reshape(B, C, R, R, R)
    return avg_voxel_features, normalized_coords


# -------------------------- pure-JAX reference ----------------------------- #
def _ref_voxelization(features, coords, *, resolution, normalize=True, eps=1e-6):
    mean_c = coords.mean(axis=1, keepdims=True)
    centered = coords - mean_c
    if normalize:
        max_norm = jnp.linalg.norm(centered, axis=2, keepdims=True).max(
            axis=1, keepdims=True)
        normalized = centered / (max_norm * 2 + eps) + 0.5
    else:
        normalized = (centered + 1.0) / 2.0
    scaled = normalized * (resolution - 1)
    vidx = jnp.round(scaled).astype(jnp.int32)
    B, N, C = features.shape
    V = resolution ** 3
    lin = (vidx[..., 0] * resolution ** 2
           + vidx[..., 1] * resolution
           + vidx[..., 2])                                 # (B, N)
    onehot = jax.nn.one_hot(lin, V, dtype=jnp.float32)     # (B, N, V)
    sums = jnp.einsum('bnv,bnc->bvc', onehot, features)
    counts = jnp.maximum(onehot.sum(axis=1)[..., None], 1.0)
    avg = sums / counts                                    # (B, V, C)
    avg = jnp.transpose(avg, (0, 2, 1)).reshape(
        B, C, resolution, resolution, resolution)
    return avg, normalized


if __name__ == "__main__":
    # Small, deterministic example shapes.
    B, N, C = 2, 1024, 8
    RESOLUTION = 8          # -> 8x8x8 voxel grid (V = 512)

    key = jax.random.PRNGKey(0)
    kf, kc = jax.random.split(key)
    features = jax.random.normal(kf, (B, N, C), dtype=jnp.float32)
    coords = jax.random.uniform(kc, (B, N, 3), dtype=jnp.float32,
                                minval=-1.0, maxval=1.0)

    ref_vox, ref_nc = _ref_voxelization(features, coords,
                                        resolution=RESOLUTION,
                                        normalize=True, eps=1e-6)

    # Default (bf16 MXU, resident feats, single N tile) path.
    avg_vox, ncoords = voxelization(features, coords,
                                    resolution=RESOLUTION,
                                    normalize=True, eps=1e-6)
    avg_vox = jax.block_until_ready(avg_vox)
    ncoords = jax.block_until_ready(ncoords)

    assert avg_vox.shape == (B, C, RESOLUTION, RESOLUTION, RESOLUTION)
    assert ncoords.shape == (B, N, 3)
    assert jnp.allclose(ncoords, ref_nc, atol=1e-5, rtol=1e-5)
    assert jnp.allclose(avg_vox, ref_vox, atol=3e-2, rtol=3e-2)   # bf16 feats

    # Full-precision path (f32 MXU + exact divide in the finalize).
    avg_vox32, _ = voxelization(features, coords,
                                resolution=RESOLUTION,
                                normalize=True, eps=1e-6,
                                matmul_dtype=jnp.float32)
    avg_vox32 = jax.block_until_ready(avg_vox32)
    assert jnp.allclose(avg_vox32, ref_vox, atol=5e-3, rtol=5e-3)

    # Multi-tile path: several V tiles + several N tiles, sparsity skip
    # active, non-resident (tiled) feature fetches.
    avg_vox_mt, _ = voxelization(features, coords,
                                 resolution=RESOLUTION,
                                 normalize=True, eps=1e-6,
                                 v_tile=128, n_tile=256, chunk=128,
                                 resident_feats_budget_bytes=0)
    avg_vox_mt = jax.block_until_ready(avg_vox_mt)
    assert jnp.allclose(avg_vox_mt, ref_vox, atol=3e-2, rtol=3e-2)

    print("KERNEL_OK")
</pallas_src>

<mosaic_0001>
module attributes {stable_mosaic.version = 11 : i64} {
  func.func @_normalize_kernel(%arg0: i32, %arg1: memref<1x3x1024xf32, #tpu.memory_space<vmem>>, %arg2: memref<1x3x1024xf32, #tpu.memory_space<vmem>>, %arg3: memref<1x1x1024xi32, #tpu.memory_space<vmem>>) attributes {dimension_semantics = [#tpu.dimension_semantics<parallel>], iteration_bounds = array<i64: 2>, scalar_prefetch = 0 : i64, scratch_operands = 0 : i64, tpu.core_type = #tpu.core_type<tc>, window_params = [{transform_indices = @transform_0, window_bounds = array<i64: 1, 3, 1024>}, {transform_indices = @transform_1, window_bounds = array<i64: 1, 3, 1024>}, {transform_indices = @transform_2, window_bounds = array<i64: 1, 1, 1024>}]} {
    %c0 = arith.constant 0 : index
    %c0_0 = arith.constant 0 : index
    %c0_1 = arith.constant 0 : index
    %0 = vector.load %arg1[%c0, %c0_0, %c0_1] : memref<1x3x1024xf32, #tpu.memory_space<vmem>>, vector<1x3x1024xf32>
    %1 = vector.shape_cast %0 : vector<1x3x1024xf32> to vector<3x1024xf32>
    %cst = arith.constant dense<0.000000e+00> : vector<3xf32>
    %2 = vector.multi_reduction <add>, %1, %cst [1] : vector<3x1024xf32> to vector<3xf32>
    %3 = vector.shape_cast %2 : vector<3xf32> to vector<3x1xf32>
    %cst_2 = arith.constant 1.024000e+03 : f32
    %4 = vector.broadcast %cst_2 : f32 to vector<3x1xf32>
    %5 = arith.divf %3, %4 : vector<3x1xf32>
    %6 = vector.broadcast %5 : vector<3x1xf32> to vector<3x1024xf32>
    %7 = arith.subf %1, %6 : vector<3x1024xf32>
    %8 = arith.mulf %7, %7 : vector<3x1024xf32>
    %cst_3 = arith.constant dense<0.000000e+00> : vector<1024xf32>
    %9 = vector.multi_reduction <add>, %8, %cst_3 [0] : vector<3x1024xf32> to vector<1024xf32>
    %10 = vector.shape_cast %9 : vector<1024xf32> to vector<1x1024xf32>
    %11 = vector.shape_cast %10 : vector<1x1024xf32> to vector<1x1x1024xf32>
    %cst_4 = arith.constant dense<0xFF800000> : vector<1xf32>
    %12 = vector.multi_reduction <maximumf>, %11, %cst_4 [1, 2] : vector<1x1x1024xf32> to vector<1xf32>
    %13 = vector.shape_cast %12 : vector<1xf32> to vector<1x1x1xf32>
    %14 = vector.extract %13[0, 0, 0] : f32 from vector<1x1x1xf32>
    %15 = vector.broadcast %14 : f32 to vector<1x1xf32>
    %16 = math.sqrt %15 : vector<1x1xf32>
    %cst_5 = arith.constant 2.000000e+00 : f32
    %17 = vector.broadcast %cst_5 : f32 to vector<1x1xf32>
    %18 = arith.mulf %16, %17 : vector<1x1xf32>
    %cst_6 = arith.constant 9.99999997E-7 : f32
    %19 = vector.broadcast %cst_6 : f32 to vector<1x1xf32>
    %20 = arith.addf %18, %19 : vector<1x1xf32>
    %cst_7 = arith.constant 1.000000e+00 : f32
    %21 = vector.broadcast %cst_7 : f32 to vector<1x1xf32>
    %22 = arith.divf %21, %20 : vector<1x1xf32>
    %23 = vector.broadcast %22 : vector<1x1xf32> to vector<3x1024xf32>
    %24 = arith.mulf %7, %23 : vector<3x1024xf32>
    %cst_8 = arith.constant 5.000000e-01 : f32
    %25 = vector.broadcast %cst_8 : f32 to vector<3x1024xf32>
    %26 = arith.addf %24, %25 : vector<3x1024xf32>
    %c0_9 = arith.constant 0 : index
    %c0_10 = arith.constant 0 : index
    %c0_11 = arith.constant 0 : index
    %27 = vector.load %arg2[%c0_9, %c0_10, %c0_11] : memref<1x3x1024xf32, #tpu.memory_space<vmem>>, vector<1x3x1024xf32>
    %28 = vector.shape_cast %27 : vector<1x3x1024xf32> to vector<3x1024xf32>
    %29 = vector.shape_cast %26 : vector<3x1024xf32> to vector<1x3x1024xf32>
    tpu.vector_store %arg2[%c0_9, %c0_10, %c0_11], %29 {strides = array<i32>} : memref<1x3x1024xf32, #tpu.memory_space<vmem>>, vector<1x3x1024xf32>,
    %cst_12 = arith.constant 7.000000e+00 : f32
    %30 = vector.broadcast %cst_12 : f32 to vector<3x1024xf32>
    %31 = arith.mulf %26, %30 : vector<3x1024xf32>
    %32 = math.roundeven %31 : vector<3x1024xf32>
    %33 = arith.fptosi %32 : vector<3x1024xf32> to vector<3x1024xi32>
    %c0_i32 = arith.constant 0 : i32
    %c7_i32 = arith.constant 7 : i32
    %34 = vector.broadcast %c0_i32 : i32 to vector<3x1024xi32>
    %35 = arith.maxsi %34, %33 : vector<3x1024xi32>
    %36 = vector.broadcast %c7_i32 : i32 to vector<3x1024xi32>
    %37 = arith.minsi %36, %35 : vector<3x1024xi32>
    %38 = vector.extract_strided_slice %37 {offsets = [0, 0], sizes = [1, 1024], strides = [1, 1]} : vector<3x1024xi32> to vector<1x1024xi32>
    %c64_i32 = arith.constant 64 : i32
    %39 = vector.broadcast %c64_i32 : i32 to vector<1x1024xi32>
    %40 = arith.muli %38, %39 : vector<1x1024xi32>
    %41 = vector.extract_strided_slice %37 {offsets = [1, 0], sizes = [1, 1024], strides = [1, 1]} : vector<3x1024xi32> to vector<1x1024xi32>
    %c8_i32 = arith.constant 8 : i32
    %42 = vector.broadcast %c8_i32 : i32 to vector<1x1024xi32>
    %43 = arith.muli %41, %42 : vector<1x1024xi32>
    %44 = arith.addi %40, %43 : vector<1x1024xi32>
    %45 = vector.extract_strided_slice %37 {offsets = [2, 0], sizes = [1, 1024], strides = [1, 1]} : vector<3x1024xi32> to vector<1x1024xi32>
    %46 = arith.addi %44, %45 : vector<1x1024xi32>
    %c0_13 = arith.constant 0 : index
    %c0_14 = arith.constant 0 : index
    %c0_15 = arith.constant 0 : index
    %47 = vector.load %arg3[%c0_13, %c0_14, %c0_15] : memref<1x1x1024xi32, #tpu.memory_space<vmem>>, vector<1x1x1024xi32>
    %48 = vector.shape_cast %47 : vector<1x1x1024xi32> to vector<1x1024xi32>
    %49 = vector.shape_cast %46 : vector<1x1024xi32> to vector<1x1x1024xi32>
    tpu.vector_store %arg3[%c0_13, %c0_14, %c0_15], %49 {strides = array<i32>} : memref<1x1x1024xi32, #tpu.memory_space<vmem>>, vector<1x1x1024xi32>,
    return
  }
  func.func @transform_0(%arg0: i32) -> (i32, i32, i32) {
    %c0_i32 = arith.constant 0 : i32
    %c0_i32_0 = arith.constant 0 : i32
    %c0_i32_1 = arith.constant 0 : i32
    return %arg0, %c0_i32, %c0_i32_0 : i32, i32, i32
  }
  func.func @transform_1(%arg0: i32) -> (i32, i32, i32) {
    %c0_i32 = arith.constant 0 : i32
    %c0_i32_0 = arith.constant 0 : i32
    %c0_i32_1 = arith.constant 0 : i32
    return %arg0, %c0_i32, %c0_i32_0 : i32, i32, i32
  }
  func.func @transform_2(%arg0: i32) -> (i32, i32, i32) {
    %c0_i32 = arith.constant 0 : i32
    %c0_i32_0 = arith.constant 0 : i32
    %c0_i32_1 = arith.constant 0 : i32
    return %arg0, %c0_i32, %c0_i32_0 : i32, i32, i32
  }
}

</mosaic_0001>

<llo_original>
// kernel: tpu_custom_call.1
$region0: #{tpu_custom_call.1}
  #allocation0 [shape = 'u32[]', space=smem, size = 0x4, offset = 0x4, fixed_abs, tag = 'smem constant byte address 0x4 - core index']
  #allocation1 [shape = 'u32[144,128]{1,0:T(1,128)}', space=vmem, size = 0x12000, scoped, tag = 'internal scratch']
  %s0 = inlined_call_operand.vmem [shape: f32[2,3,1024], index: 0, kind: input, shape index: {}]
  %s1 = inlined_call_operand.vmem [shape: f32[2,3,1024], index: 1, kind: output, shape index: {0}]
  %s2 = inlined_call_operand.hbm [shape: s32[2,1,1024], index: 2, kind: output, shape index: {1}]
  %3 = xla_tuple %s1, %s2
  %s4 = sld [smem:[#allocation0]]
  $region45: #{tpu_custom_call.1} parent=0
    _
  %s6 = ssub.s32 1, %s4
  %s7 = scalar_select 0, %s6, %s4
  $region1: #{tpu_custom_call.1} parent=0
    #allocation2 [shape = 'u8[8192]{0}', space=vmem, size = 0x2000, scoped, tag = 'output window, operand 1']
    #allocation3 [shape = 's32[2]{0}', space=sflag, size = 0x8, scoped, tag = 'scoped memory for tpu_custom_call.1']
    %8 = vsyncpa [#allocation3], 0
    %s9 = scalar_lea.sflag [#allocation3], 1
    %10 = vsyncpa %s9, 0
    loop: start=0, step=1, limit=4
    $region2: #{tpu_custom_call.1} parent=1 // loop_pre_header
      _
    $region3: #{tpu_custom_call.1} parent=1 // loop_header
      %s12 = sphi 0, %s16
      %p13 = scmp.ge.s32.totalorder %s12, 4
      %s22 = sphi 0, %s24
      %s25 = sphi 0, %s22
      %s26 = sphi 0, %s25
      %s42 = sphi 0, %s26
      %s48 = sphi 0, %s50
      %s51 = sphi 0, %s48
      %s52 = sphi 0, %s51
      %s68 = sphi 0, %s52
      %s74 = sphi 0, %s76
      %s77 = sphi 0, %s74
      %s78 = sphi 0, %s77
      %s94 = sphi 0, %s78
    $region4: #{tpu_custom_call.1} parent=1 // loop_header_branch
      %15 = sbr.rel (%p13) target = $region8
    $region5: #{tpu_custom_call.1} parent=1 // loop_body
      %s17 = ssub.s32 %s12, 1
      %s18 = ssub.s32 %s12, 2
      %s19 = sadd.s32 %s12, 1
      %s20 = ssub.s32 %s12, %s19
      %p21 = scmp.eq.s32.totalorder %s20, 0
      %s23 = sadd.s32 %s22, 1
      %s24 = scalar_select %p21, %s22, %s23
      %p27 = pneg %p21
      %p28 = scmp.eq.s32.totalorder %s12, 1
      %p29 = por %p27, %p28
      %p30 = scmp.ne.s32.totalorder %s22, %s25
      %p31 = scmp.eq.s32.totalorder %s12, 0
      %p32 = por %p30, %p31
      %p33 = scmp.ne.s32.totalorder %s22, %s25
      %p34 = scmp.eq.s32.totalorder %s17, 1
      %p35 = por %p33, %p34
      %p36 = scmp.ne.s32.totalorder %s25, %s26
      %p37 = scmp.eq.s32.totalorder %s17, 0
      %p38 = por %p36, %p37
      %p39 = scmp.ne.s32.totalorder %s25, %s26
      %p40 = scmp.eq.s32.totalorder %s18, 1
      %p41 = por %p39, %p40
      %p43 = scmp.ne.s32.totalorder %s26, %s42
      %p44 = scmp.eq.s32.totalorder %s18, 0
      %p45 = por %p43, %p44
      %s46 = ssub.s32 %s12, %s19
      %p47 = scmp.eq.s32.totalorder %s46, 0
      %s49 = sadd.s32 %s48, 1
      %s50 = scalar_select %p47, %s48, %s49
      %p53 = pneg %p47
      %p54 = scmp.eq.s32.totalorder %s12, 1
      %p55 = por %p53, %p54
      %p56 = scmp.ne.s32.totalorder %s48, %s51
      %p57 = scmp.eq.s32.totalorder %s12, 0
      %p58 = por %p56, %p57
      %p59 = scmp.ne.s32.totalorder %s48, %s51
      %p60 = scmp.eq.s32.totalorder %s17, 1
      %p61 = por %p59, %p60
      %p62 = scmp.ne.s32.totalorder %s51, %s52
      %p63 = scmp.eq.s32.totalorder %s17, 0
      %p64 = por %p62, %p63
      %p65 = scmp.ne.s32.totalorder %s51, %s52
      %p66 = scmp.eq.s32.totalorder %s18, 1
      %p67 = por %p65, %p66
      %p69 = scmp.ne.s32.totalorder %s52, %s68
      %p70 = scmp.eq.s32.totalorder %s18, 0
      %p71 = por %p69, %p70
      %s72 = ssub.s32 %s12, %s19
      %p73 = scmp.eq.s32.totalorder %s72, 0
      %s75 = sadd.s32 %s74, 1
      %s76 = scalar_select %p73, %s74, %s75
      %p79 = pneg %p73
      %p80 = scmp.eq.s32.totalorder %s12, 1
      %p81 = por %p79, %p80
      %p82 = scmp.ne.s32.totalorder %s74, %s77
      %p83 = scmp.eq.s32.totalorder %s12, 0
      %p84 = por %p82, %p83
      %p85 = scmp.ne.s32.totalorder %s74, %s77
      %p86 = scmp.eq.s32.totalorder %s17, 1
      %p87 = por %p85, %p86
      %p88 = scmp.ne.s32.totalorder %s77, %s78
      %p89 = scmp.eq.s32.totalorder %s17, 0
      %p90 = por %p88, %p89
      %p91 = scmp.ne.s32.totalorder %s77, %s78
      %p92 = scmp.eq.s32.totalorder %s18, 1
      %p93 = por %p91, %p92
      %p95 = scmp.ne.s32.totalorder %s78, %s94
      %p96 = scmp.eq.s32.totalorder %s18, 0
      %p97 = por %p95, %p96
      %p98 = scmp.le.s32.totalorder 1, %s12
      %p99 = scmp.lt.s32.totalorder %s12, 3
      %p100 = pnand %p98, %p99
      %p101 = pneg %p100
      // Predicated region
      $region9: #{tpu_custom_call.1} parent=5 // pred_check
        _
      $region10: #{tpu_custom_call.1} parent=5 // pred_check_branch
        %103 = sbr.rel (%p100) target = $region12
      $region11: #{tpu_custom_call.1} parent=5 // pred_region
        %s104 = ssub.s32 %s12, 1
      $region12: #{tpu_custom_call.1} parent=5 // pred_fallthru
        _
      %p105 = scmp.lt.s32.totalorder %s12, 2
      // Predicated region
      $region13: #{tpu_custom_call.1} parent=5 // pred_check
        %p106 = pneg %p105
      $region14: #{tpu_custom_call.1} parent=5 // pred_check_branch
        %108 = sbr.rel (%p106) target = $region16
      $region15: #{tpu_custom_call.1} parent=5 // pred_region
        // Predicated region
        $region17: #{tpu_custom_call.1} parent=15 // pred_check
          %p109 = pneg %p32
        $region18: #{tpu_custom_call.1} parent=15 // pred_check_branch
          %111 = sbr.rel (%p109) target = $region20
        $region19: #{tpu_custom_call.1} parent=15 // pred_region
          %p112 = scmp.lt.s32.totalorder %s12, 1
          %s113 = scalar_select %p112, %s12, 1
          %s114 = smul.addr %s113, 8
          %s115 = smul.addr %s114, 4
          %s116 = scalar_lea.vmem %s0, %s115
        $region20: #{tpu_custom_call.1} parent=15 // pred_fallthru
          _
      $region16: #{tpu_custom_call.1} parent=5 // pred_fallthru
        _
      %p117 = scmp.le.s32.totalorder 1, %s12
      %p118 = scmp.lt.s32.totalorder %s12, 3
      %p119 = pnand %p117, %p118
      %p120 = pneg %p119
      // Predicated region
      $region21: #{tpu_custom_call.1} parent=5 // pred_check
        _
      $region22: #{tpu_custom_call.1} parent=5 // pred_check_branch
        %122 = sbr.rel (%p119) target = $region24
      $region23: #{tpu_custom_call.1} parent=5 // pred_region
        %s123 = ssub.s32 %s12, 1
        %p124 = scmp.lt.s32.totalorder %s17, 1
        %s125 = scalar_select %p124, %s17, 1
        %s126 = smul.addr %s125, 8
        %s127 = smul.addr %s126, 4
        %s128 = scalar_lea.vmem %s0, %s127
        %p129 = pneg %p38
        %p130 = pneg %p35
        %p131 = pneg %p64
        %p132 = pneg %p61
        %p133 = scmp.lt.s32.totalorder %s17, 1
        %s134 = scalar_select %p133, %s17, 1
        %s135 = smul.addr %s134, 8
        %s136 = smul.addr %s135, 4
        %s137 = scalar_lea.vmem %s1, %s136
        %p138 = pneg %p90
        %p139 = pneg %p87
        %s140 = sand.u32 %s77, 1
        %s141 = scalar_lea.sflag [#allocation3], %s140
        %s142 = sand.u32 %s77, 1
        %s143 = smul.addr %s142, 8
        %s144 = scalar_lea.vmem [#allocation2], %s143
        %p145 = scmp.lt.s32.totalorder %s17, 1
        %s146 = scalar_select %p145, %s17, 1
        %s147 = smul.addr %s146, 8
        %s148 = smul.addr %s147, 4
        %s149 = scalar_lea.vmem %s0, %s148
        %p150 = scmp.lt.s32.totalorder %s17, 1
        %s151 = scalar_select %p150, %s17, 1
        %s152 = smul.addr %s151, 8
        %s153 = smul.addr %s152, 4
        %s154 = scalar_lea.vmem %s1, %s153
        %v155 = vld [vmem:[%s149] sm:$0x77]
        %v156 = vld [vmem:[%s149 + $0x8] sm:$0x77]
        %v157 = vld [vmem:[%s149 + $0x10] sm:$0x77]
        %v158 = vld [vmem:[%s149 + $0x18] sm:$0x77]
        %v163 = vcombine.high %v155, %v155
        %v164 = vcombine.high %v156, %v156
        %v165 = vcombine.high %v157, %v157
        %v166 = vcombine.high %v158, %v158
        %vm171 = vcmask 1042432
        %v172 = vsel %vm171, %v155, 0.0
        %v173 = vsel %vm171, %v163, 0.0
        %v174 = vadd.f32 %v172, %v173
        %v175 = vsel %vm171, %v156, 0.0
        %v176 = vadd.f32 %v174, %v175
        %v177 = vsel %vm171, %v164, 0.0
        %v178 = vadd.f32 %v176, %v177
        %v179 = vsel %vm171, %v157, 0.0
        %v180 = vadd.f32 %v178, %v179
        %v181 = vsel %vm171, %v165, 0.0
        %v182 = vadd.f32 %v180, %v181
        %v183 = vsel %vm171, %v158, 0.0
        %v184 = vadd.f32 %v182, %v183
        %v185 = vsel %vm171, %v166, 0.0
        %v186 = vadd.f32 %v184, %v185
        %187 = vadd.xlane.f32.xlu0 %v186
        %v188 = vpop.xlane.xlu0 %187
        %v189 = vrcp.pop 1024.0
        %v190 = vmul.f32 %v188, %v189
        %v193 = vunpack.c.l.s4 839922192
        %v194 = vunpack.c.0.s8 %v193
        %v195 = vlaneseq
        %v196 = vshrl.u32 %v195, 7
        %v197 = vsub.s32 %v194, %v196
        %v198 = vrot.slane %v190, %v197
        %v200 = vsub.f32 %v155, %v198
        %v201 = vsub.f32 %v156, %v198
        %v202 = vsub.f32 %v157, %v198
        %v203 = vsub.f32 %v158, %v198
        %v204 = vmul.f32 %v200, %v200
        %v205 = vmul.f32 %v201, %v201
        %v206 = vmul.f32 %v202, %v202
        %v207 = vmul.f32 %v203, %v203
        %v212 = vcombine.high %v204, %v204
        %v213 = vcombine.high %v205, %v205
        %v214 = vcombine.high %v206, %v206
        %v215 = vcombine.high %v207, %v207
        %v220 = vsel %vm171, %v204, 0.0
        %v221 = vrot.slane %v220, 4
        %v222 = vadd.f32 %v220, %v221
        %v223 = vrot.slane %v222, 2
        %v224 = vadd.f32 %v222, %v223
        %v225 = vrot.slane %v224, 1
        %v226 = vadd.f32 %v224, %v225
        %v227 = vsel %vm171, %v212, 0.0
        %v228 = vrot.slane %v227, 4
        %v229 = vadd.f32 %v227, %v228
        %v230 = vrot.slane %v229, 2
        %v231 = vadd.f32 %v229, %v230
        %v232 = vrot.slane %v231, 1
        %v233 = vadd.f32 %v231, %v232
        %v234 = vsel %vm171, %v205, 0.0
        %v235 = vrot.slane %v234, 4
        %v236 = vadd.f32 %v234, %v235
        %v237 = vrot.slane %v236, 2
        %v238 = vadd.f32 %v236, %v237
        %v239 = vrot.slane %v238, 1
        %v240 = vadd.f32 %v238, %v239
        %v241 = vsel %vm171, %v213, 0.0
        %v242 = vrot.slane %v241, 4
        %v243 = vadd.f32 %v241, %v242
        %v244 = vrot.slane %v243, 2
        %v245 = vadd.f32 %v243, %v244
        %v246 = vrot.slane %v245, 1
        %v247 = vadd.f32 %v245, %v246
        %v248 = vsel %vm171, %v206, 0.0
        %v249 = vrot.slane %v248, 4
        %v250 = vadd.f32 %v248, %v249
        %v251 = vrot.slane %v250, 2
        %v252 = vadd.f32 %v250, %v251
        %v253 = vrot.slane %v252, 1
        %v254 = vadd.f32 %v252, %v253
        %v255 = vsel %vm171, %v214, 0.0
        %v256 = vrot.slane %v255, 4
        %v257 = vadd.f32 %v255, %v256
        %v258 = vrot.slane %v257, 2
        %v259 = vadd.f32 %v257, %v258
        %v260 = vrot.slane %v259, 1
        %v261 = vadd.f32 %v259, %v260
        %v262 = vsel %vm171, %v207, 0.0
        %v263 = vrot.slane %v262, 4
        %v264 = vadd.f32 %v262, %v263
        %v265 = vrot.slane %v264, 2
        %v266 = vadd.f32 %v264, %v265
        %v267 = vrot.slane %v266, 1
        %v268 = vadd.f32 %v266, %v267
        %v269 = vsel %vm171, %v215, 0.0
        %v270 = vrot.slane %v269, 4
        %v271 = vadd.f32 %v269, %v270
        %v272 = vrot.slane %v271, 2
        %v273 = vadd.f32 %v271, %v272
        %v274 = vrot.slane %v273, 1
        %v275 = vadd.f32 %v273, %v274
        %v276 = vmax.f32 %v226, %v254
        %v277 = vmax.f32 %v233, %v261
        %v278 = vmax.f32 %v240, %v268
        %v279 = vmax.f32 %v247, %v275
        %v280 = vmax.f32 %v276, %v277
        %v281 = vmax.f32 %v278, %v279
        %v282 = vmax.f32 %v280, %v281
        %283 = vmax.xlane.f32.xlu0 %v282
        %v284 = vpop.xlane.xlu0 %283
        %s285 = vtos %v284
        %v286 = vstv %s285
        %v287 = vrsqrt.pop %v286
        %v288 = vmul.f32 %v286, %v287
        %vm289 = vcmp.eq.f32.partialorder %v286, inf
        %v290 = vsel %vm289, %v286, %v288
        %vm291 = vcmp.eq.f32.partialorder %v286, 0.0
        %v292 = vand.u32 %v286, 2147483648
        %v293 = vsel %vm291, %v292, %v290
        %v294 = vmul.f32 %v293, 2.0
        %v295 = vadd.f32 %v294, 1e-06
        %v296 = vrcp.pop %v295
        %v297 = vmul.f32 1.0, %v296
        %v298 = vmul.f32 %v200, %v297
        %v299 = vmul.f32 %v201, %v297
        %v300 = vmul.f32 %v202, %v297
        %v301 = vmul.f32 %v203, %v297
        %v302 = vadd.f32 %v298, 0.5
        %v303 = vadd.f32 %v299, 0.5
        %v304 = vadd.f32 %v300, 0.5
        %v305 = vadd.f32 %v301, 0.5
        %306 = vst [vmem:[%s154] sm:$0x77] %v302
        %307 = vst [vmem:[%s154 + $0x8] sm:$0x77] %v303
        %308 = vst [vmem:[%s154 + $0x10] sm:$0x77] %v304
        %309 = vst [vmem:[%s154 + $0x18] sm:$0x77] %v305
        %v310 = vmul.f32 %v302, 7.0
        %v311 = vmul.f32 %v303, 7.0
        %v312 = vmul.f32 %v304, 7.0
        %v313 = vmul.f32 %v305, 7.0
        %v314 = vcvt.f32.s32.ties.to.even %v310
        %v315 = vcvt.f32.s32.ties.to.even %v311
        %v316 = vcvt.f32.s32.ties.to.even %v312
        %v317 = vcvt.f32.s32.ties.to.even %v313
        %vm318 = vcmp.gt.s32.totalorder %v314, 0
        %v319 = vsel %vm318, %v314, 0
        %vm320 = vcmp.gt.s32.totalorder %v315, 0
        %v321 = vsel %vm320, %v315, 0
        %vm322 = vcmp.gt.s32.totalorder %v316, 0
        %v323 = vsel %vm322, %v316, 0
        %vm324 = vcmp.gt.s32.totalorder %v317, 0
        %v325 = vsel %vm324, %v317, 0
        %vm326 = vcmp.lt.s32.totalorder %v319, 7
        %v327 = vsel %vm326, %v319, 7
        %vm328 = vcmp.lt.s32.totalorder %v321, 7
        %v329 = vsel %vm328, %v321, 7
        %vm330 = vcmp.lt.s32.totalorder %v323, 7
        %v331 = vsel %vm330, %v323, 7
        %vm332 = vcmp.lt.s32.totalorder %v325, 7
        %v333 = vsel %vm332, %v325, 7
        %v334 = vmul.u32 %v327, 64
        %v335 = vmul.u32 %v329, 64
        %v336 = vmul.u32 %v331, 64
        %v337 = vmul.u32 %v333, 64
        %v338 = vmul.u32 %v327, 8
        %v339 = vmul.u32 %v329, 8
        %v340 = vmul.u32 %v331, 8
        %v341 = vmul.u32 %v333, 8
        %v342 = vrot.slane %v338, 5
        %v343 = vrot.slane %v342, 4
        %v344 = vrot.slane %v339, 5
        %v345 = vrot.slane %v344, 4
        %v346 = vrot.slane %v340, 5
        %v347 = vrot.slane %v346, 4
        %v348 = vrot.slane %v341, 5
        %v349 = vrot.slane %v348, 4
        %v350 = vadd.s32 %v334, %v343
        %v351 = vadd.s32 %v335, %v345
        %v352 = vadd.s32 %v336, %v347
        %v353 = vadd.s32 %v337, %v349
        %v354 = vrot.slane %v327, 6
        %v355 = vrot.slane %v354, 4
        %v356 = vrot.slane %v329, 6
        %v357 = vrot.slane %v356, 4
        %v358 = vrot.slane %v331, 6
        %v359 = vrot.slane %v358, 4
        %v360 = vrot.slane %v333, 6
        %v361 = vrot.slane %v360, 4
        %v362 = vadd.s32 %v350, %v355
        %v363 = vadd.s32 %v351, %v357
        %v364 = vadd.s32 %v352, %v359
        %v365 = vadd.s32 %v353, %v361
        %v367 = vunpack.c.l.s4 1966171168
        %v368 = vunpack.c.0.s8 %v367
        %v369 = vlaneseq
        %v370 = vshrl.u32 %v369, 7
        %v371 = vsub.s32 %v368, %v370
        %v372 = vrot.slane %v362, %v371
        %v374 = vunpack.c.l.s4 1966171168
        %v375 = vunpack.c.0.s8 %v374
        %v376 = vlaneseq
        %v377 = vshrl.u32 %v376, 7
        %v378 = vsub.s32 %v375, %v377
        %v379 = vrot.slane %v363, %v378
        %v381 = vunpack.c.l.s4 1966171168
        %v382 = vunpack.c.0.s8 %v381
        %v383 = vlaneseq
        %v384 = vshrl.u32 %v383, 7
        %v385 = vsub.s32 %v382, %v384
        %v386 = vrot.slane %v364, %v385
        %v388 = vunpack.c.l.s4 1966171168
        %v389 = vunpack.c.0.s8 %v388
        %v390 = vlaneseq
        %v391 = vshrl.u32 %v390, 7
        %v392 = vsub.s32 %v389, %v391
        %v393 = vrot.slane %v365, %v392
        %v394 = vcombine.low %v372, %v379
        %v395 = vcombine.low %v386, %v393
        %v397 = vunpack.c.l.s4 1966171168
        %v398 = vunpack.c.0.s8 %v397
        %v399 = vlaneseq
        %v400 = vshrl.u32 %v399, 7
        %v401 = vsub.s32 %v398, %v400
        %v402 = vrot.slane %v394, %v401
        %v404 = vunpack.c.l.s4 1966171168
        %v405 = vunpack.c.0.s8 %v404
        %v406 = vlaneseq
        %v407 = vshrl.u32 %v406, 7
        %v408 = vsub.s32 %v405, %v407
        %v409 = vrot.slane %v395, %v408
        %v410 = vcombine.low %v402, %v409
        %411 = vst [vmem:[%s144] sm:$0xff] %v410
        %p412 = scmp.lt.s32.totalorder %s17, 1
        %s413 = scalar_select %p412, %s17, 1
        %s414 = smul.addr %s413, 8
        %s415 = smul.addr %s414, 4
        %s416 = scalar_lea.vmem %s1, %s415
        %s417 = sand.u32 %s77, 1
        %s418 = scalar_lea.sflag [#allocation3], %s417
        %s419 = sand.u32 %s77, 1
        %s420 = smul.addr %s419, 8
        %s421 = scalar_lea.vmem [#allocation2], %s420
        // Predicated region
        $region25: #{tpu_custom_call.1} parent=23 // pred_check
          %p422 = pneg %p61
        $region26: #{tpu_custom_call.1} parent=23 // pred_check_branch
          %424 = sbr.rel (%p422) target = $region28
        $region27: #{tpu_custom_call.1} parent=23 // pred_region
          _
        $region28: #{tpu_custom_call.1} parent=23 // pred_fallthru
          _
        // Predicated region
        $region29: #{tpu_custom_call.1} parent=23 // pred_check
          %p425 = pneg %p87
        $region30: #{tpu_custom_call.1} parent=23 // pred_check_branch
          %427 = sbr.rel (%p425) target = $region32
        $region31: #{tpu_custom_call.1} parent=23 // pred_region
          %s429 = ssub.s32 128, 128
          %430 = vsyncadd %s418, %s429
          %s431 = smul.addr %s17, 8
          %s432 = smul.addr %s431, 16
          %s433 = scalar_lea.hbm %s2, %s432
          %s435 = sshll.u32 %s421, 4
          %s436 = int_to_ptr.vmem [resolvable:$true] %s435
          %438 = dma.vmem_to_hbm [thread:$0]  %s436, 128, %s433, %s418
        $region32: #{tpu_custom_call.1} parent=23 // pred_fallthru
          _
      $region24: #{tpu_custom_call.1} parent=5 // pred_fallthru
        _
      %p439 = scmp.le.s32.totalorder 2, %s12
      // Predicated region
      $region33: #{tpu_custom_call.1} parent=5 // pred_check
        %p440 = pneg %p439
      $region34: #{tpu_custom_call.1} parent=5 // pred_check_branch
        %442 = sbr.rel (%p440) target = $region36
      $region35: #{tpu_custom_call.1} parent=5 // pred_region
        %s443 = ssub.s32 %s12, 2
        // Predicated region
        $region37: #{tpu_custom_call.1} parent=35 // pred_check
          %p444 = pneg %p67
        $region38: #{tpu_custom_call.1} parent=35 // pred_check_branch
          %446 = sbr.rel (%p444) target = $region40
        $region39: #{tpu_custom_call.1} parent=35 // pred_region
          %p447 = scmp.lt.s32.totalorder %s18, 1
          %s448 = scalar_select %p447, %s18, 1
          %s449 = smul.addr %s448, 8
          %s450 = smul.addr %s449, 4
          %s451 = scalar_lea.vmem %s1, %s450
        $region40: #{tpu_custom_call.1} parent=35 // pred_fallthru
          _
        // Predicated region
        $region41: #{tpu_custom_call.1} parent=35 // pred_check
          %p452 = pneg %p93
        $region42: #{tpu_custom_call.1} parent=35 // pred_check_branch
          %454 = sbr.rel (%p452) target = $region44
        $region43: #{tpu_custom_call.1} parent=35 // pred_region
          %s455 = sand.u32 %s78, 1
          %s456 = scalar_lea.sflag [#allocation3], %s455
          %s457 = sand.u32 %s78, 1
          %s458 = smul.addr %s457, 8
          %s459 = scalar_lea.vmem [#allocation2], %s458
          %460 = dma.done %s456, 128
        $region44: #{tpu_custom_call.1} parent=35 // pred_fallthru
          _
      $region36: #{tpu_custom_call.1} parent=5 // pred_fallthru
        _
    $region6: #{tpu_custom_call.1} parent=1 // loop_footer
      %s16 = sadd.s32 1, %s12
    $region7: #{tpu_custom_call.1} parent=1 // loop_footer_branch
      %11 = sbr.rel target = $region3
    $region8: #{tpu_custom_call.1} parent=1 // loop_exit
      _
    %461 = vsyncpa [#allocation3], 1
    %s462 = scalar_lea.sflag [#allocation3], 1
    %463 = vsyncpa %s462, 1

</llo_original>
